<compile_context>
chip_gen: v5e
topology: v5e:2x2
jax: 0.10.0
libtpu: 0.0.40
codegen_flags: <defaults>
</compile_context>

<pallas_src>
import functools

import jax
import jax.numpy as jnp
import numpy as np
from jax import lax
from jax.experimental import pallas as pl
from jax.experimental.pallas import tpu as pltpu


def rnn_kernel(x_ref, wih_ref, whh_ref, b_ref, wfc_ref, bfc_ref, out_ref,
               h_scratch, xp_scratch, *, seq_len, t_chunk, masked, unroll, mxu_dtype):
    """One grid step == (batch block b, time chunk c).

    Per chunk:
      xp[t, :, :] = x[t, :, :] @ W_ih^T + (b_ih + b_hh)   (merged matmul, no sequential dep)
      for t in chunk: h = tanh(xp[t] + h @ W_hh^T)         (only serial work)
    On the last chunk:
      out = h @ W_fc^T + b_fc
    """
    c = pl.program_id(1)
    n_c = pl.num_programs(1)

    @pl.when(c == 0)
    def _():
        h_scratch[...] = jnp.zeros_like(h_scratch)

    # ---- Input projection: one merged MXU matmul over the whole chunk. ----
    tc, bb, d_in = x_ref.shape
    hdim = wih_ref.shape[1]
    x_flat = x_ref[...].reshape(tc * bb, d_in).astype(mxu_dtype)   # free merge (minor dim kept)
    xp = jnp.dot(x_flat, wih_ref[...], preferred_element_type=jnp.float32) + b_ref[...]
    xp_scratch[...] = xp.reshape(tc, bb, hdim).astype(xp_scratch.dtype)

    # ---- Serial recurrence: only h @ W_hh^T + tanh sits on the critical chain. ----
    whh = whh_ref[...]          # (H, H), hoisted out of the loop (already in mxu_dtype)

    def make_step(apply_mask):
        def step(i, h):
            x_t = xp_scratch[i].astype(jnp.float32)       # contiguous leading-axis load
            h_new = jnp.tanh(
                x_t + jnp.dot(h.astype(mxu_dtype), whh,
                              preferred_element_type=jnp.float32))
            if apply_mask:
                # Padded timesteps (T not a multiple of T_CHUNK) leave h unchanged.
                valid = (c * t_chunk + i) < seq_len
                h_new = jnp.where(valid, h_new, h)
            return h_new
        return step

    if masked:
        # Only the last time chunk can contain padded steps -> gate the select.
        @pl.when(c < n_c - 1)
        def _():
            h_scratch[...] = lax.fori_loop(0, t_chunk, make_step(False),
                                           h_scratch[...], unroll=unroll)

        @pl.when(c == n_c - 1)
        def _():
            h_scratch[...] = lax.fori_loop(0, t_chunk, make_step(True),
                                           h_scratch[...], unroll=unroll)

        h = h_scratch[...]
    else:
        h = lax.fori_loop(0, t_chunk, make_step(False), h_scratch[...], unroll=unroll)
        h_scratch[...] = h

    @pl.when(c == n_c - 1)
    def _():
        out_ref[...] = (
            jnp.dot(h.astype(mxu_dtype), wfc_ref[...],
                    preferred_element_type=jnp.float32)
            + bfc_ref[...]
        ).astype(out_ref.dtype)


def _round_up(x, m):
    return (x + m - 1) // m * m


def _vmem_bytes(t_chunk, b_blk, d_in, h, o, w_bytes, xp_bytes):
    """Conservative VMEM budget (double-buffered inputs counted)."""
    x_buf = 2 * t_chunk * b_blk * d_in * 4            # x chunk (f32 HBM), double-buffered
    xp = t_chunk * b_blk * h * xp_bytes                # per-chunk input projection scratch
    hid = b_blk * h * 4                                # hidden-state carry
    weights = 2 * (d_in * h + h * h + h * o) * w_bytes # invariant weights (double-buffered)
    biases = 2 * (h + o) * 4
    out = 2 * b_blk * o * 4
    return x_buf + xp + hid + weights + biases + out


def rnn_forward(x, w_ih, w_hh, b_ih, b_hh, w_fc, b_fc, *,
                t_chunk=None, b_block=None,
                mxu_dtype=jnp.bfloat16, xp_dtype=jnp.float32,
                vmem_target_bytes=40 * 1024 * 1024):
    """x: (B, T, D_in) f32 (batch_first).  Weights in PyTorch convention:
    w_ih (H, D_in), w_hh (H, H), b_ih (H,), b_hh (H,), w_fc (O, H), b_fc (O,).

    mxu_dtype: dtype of matmul operands (bf16 default; f32 for tight parity).
    xp_dtype : storage dtype of the per-chunk input-projection scratch (bf16 for
               VMEM-tight configs, e.g. large H / T_CHUNK on v7x's 64 MiB VMEM).
    """
    B, T, D_in = x.shape
    H = w_ih.shape[0]
    O = w_fc.shape[0]

    # ---- Batch block: single big block on v5e/v6e; >=2 parallel blocks on v7x (2 TCs). ----
    if b_block is None:
        device_kind = jax.devices()[0].device_kind.lower()
        if "v7" in device_kind and B >= 16:
            b_block = _round_up(pl.cdiv(B, 2), 8)
        else:
            b_block = _round_up(min(max(B, 1), 256), 8)
    B_BLK = max(8, _round_up(b_block, 8))

    w_bytes = jnp.dtype(mxu_dtype).itemsize
    xp_bytes = jnp.dtype(xp_dtype).itemsize

    # ---- Time chunk: whole sequence when short, shrink until the VMEM budget fits. ----
    if t_chunk is None:
        t_chunk = min(T, 128)
        while (t_chunk > 8 and
               _vmem_bytes(t_chunk, B_BLK, D_in, H, O, w_bytes, xp_bytes)
               > vmem_target_bytes):
            t_chunk = max(8, t_chunk // 2)
    T_CHUNK = t_chunk

    n_c = pl.cdiv(T, T_CHUNK)
    n_b = pl.cdiv(B, B_BLK)
    T_pad = n_c * T_CHUNK
    B_pad = n_b * B_BLK

    x_p = x
    if (B_pad, T_pad) != (B, T):
        x_p = jnp.pad(x, ((0, B_pad - B), (0, T_pad - T), (0, 0)))
    masked = T_pad != T

    # Time-major layout so the per-step read inside the kernel is a leading-axis load.
    x_tm = jnp.swapaxes(x_p, 0, 1)                      # (T_pad, B_pad, D_in)

    # Pre-transpose / combine / cast once in plain JAX (layout plumbing, not the hot path).
    wih_t = w_ih.T.astype(mxu_dtype)                    # (D_in, H)
    whh_t = w_hh.T.astype(mxu_dtype)                    # (H, H)
    b_comb = (b_ih + b_hh).reshape(1, H).astype(jnp.float32)
    wfc_t = w_fc.T.astype(mxu_dtype)                    # (H, O)
    bfc = b_fc.reshape(1, O).astype(jnp.float32)

    vmem_need = _vmem_bytes(T_CHUNK, B_BLK, D_in, H, O, w_bytes, xp_bytes)
    vmem_limit = int(max(32 * 1024 * 1024, vmem_need * 1.25 + (2 << 20)))

    kernel = functools.partial(
        rnn_kernel,
        seq_len=T,
        t_chunk=T_CHUNK,
        masked=masked,
        unroll=(True if T_CHUNK <= 32 else 8),
        mxu_dtype=mxu_dtype,
    )

    out = pl.pallas_call(
        kernel,
        out_shape=jax.ShapeDtypeStruct((B_pad, O), x.dtype),
        grid_spec=pltpu.PrefetchScalarGridSpec(
            num_scalar_prefetch=0,
            grid=(n_b, n_c),
            in_specs=[
                pl.BlockSpec((T_CHUNK, B_BLK, D_in), lambda b, c: (c, b, 0)),  # x chunk (time-major)
                pl.BlockSpec((D_in, H), lambda b, c: (0, 0)),                  # W_ih^T
                pl.BlockSpec((H, H), lambda b, c: (0, 0)),                     # W_hh^T
                pl.BlockSpec((1, H), lambda b, c: (0, 0)),                     # b_ih + b_hh
                pl.BlockSpec((H, O), lambda b, c: (0, 0)),                     # W_fc^T
                pl.BlockSpec((1, O), lambda b, c: (0, 0)),                     # b_fc
            ],
            out_specs=pl.BlockSpec((B_BLK, O), lambda b, c: (b, 0)),
            scratch_shapes=[
                pltpu.VMEM((B_BLK, H), jnp.float32),              # hidden-state carry
                pltpu.VMEM((T_CHUNK, B_BLK, H), xp_dtype),        # per-chunk input projection
            ],
        ),
        compiler_params=pltpu.CompilerParams(
            # batch blocks are independent (parallel); time chunks are a serial recurrence.
            dimension_semantics=("parallel", "arbitrary"),
            vmem_limit_bytes=vmem_limit,
        ),
    )(x_tm, wih_t, whh_t, b_comb, wfc_t, bfc)

    return out[:B] if B_pad != B else out


def rnn_reference(x, w_ih, w_hh, b_ih, b_hh, w_fc, b_fc):
    """Pure-JAX reference matching nn.RNN(tanh, batch_first) + nn.Linear."""
    B, T, D_in = x.shape
    H = w_ih.shape[0]
    h0 = jnp.zeros((B, H), jnp.float32)

    def step(h, x_t):
        h_new = jnp.tanh(x_t @ w_ih.T + b_ih + h @ w_hh.T + b_hh)
        return h_new, None

    h_last, _ = lax.scan(step, h0, jnp.swapaxes(x, 0, 1))
    return h_last @ w_fc.T + b_fc


if __name__ == "__main__":
    # Small shapes consistent with the module defaults: batch=2, seq=8, input_dim=16,
    # hidden_dim=128 (module default, lane-dense), output_dim=8.
    B, T, D_in, H, O = 2, 8, 16, 128, 8

    key = jax.random.PRNGKey(0)
    kx, k1, k2, k3, k4, k5, k6, kx2 = jax.random.split(key, 8)

    x = jax.random.normal(kx, (B, T, D_in), dtype=jnp.float32)

    # Deterministic parameter init (uniform(-1/sqrt(H), 1/sqrt(H)), like PyTorch default).
    s = 1.0 / jnp.sqrt(jnp.float32(H))
    w_ih = jax.random.uniform(k1, (H, D_in), jnp.float32, -s, s)
    w_hh = jax.random.uniform(k2, (H, H), jnp.float32, -s, s)
    b_ih = jax.random.uniform(k3, (H,), jnp.float32, -s, s)
    b_hh = jax.random.uniform(k4, (H,), jnp.float32, -s, s)
    w_fc = jax.random.uniform(k5, (O, H), jnp.float32, -s, s)
    b_fc = jax.random.uniform(k6, (O,), jnp.float32, -s, s)

    ref = rnn_reference(x, w_ih, w_hh, b_ih, b_hh, w_fc, b_fc)

    # 1) f32 MXU operands: tight parity with the reference.
    out_f32 = rnn_forward(x, w_ih, w_hh, b_ih, b_hh, w_fc, b_fc,
                          mxu_dtype=jnp.float32)
    out_f32 = jax.block_until_ready(out_f32)
    np.testing.assert_allclose(np.asarray(out_f32), np.asarray(ref), rtol=1e-5, atol=1e-5)

    # 2) bf16 MXU operands (default fast path): f32 accumulation, looser tolerance.
    out_bf16 = jax.block_until_ready(
        rnn_forward(x, w_ih, w_hh, b_ih, b_hh, w_fc, b_fc))
    np.testing.assert_allclose(np.asarray(out_bf16), np.asarray(ref), rtol=5e-2, atol=5e-2)

    # 3) Ragged shapes: batch padding + multiple time chunks + gated padding-mask path.
    B2, T2 = 3, 10
    x2 = jax.random.normal(kx2, (B2, T2, D_in), dtype=jnp.float32)
    ref2 = rnn_reference(x2, w_ih, w_hh, b_ih, b_hh, w_fc, b_fc)
    out2 = jax.block_until_ready(
        rnn_forward(x2, w_ih, w_hh, b_ih, b_hh, w_fc, b_fc,
                    t_chunk=4, mxu_dtype=jnp.float32))
    np.testing.assert_allclose(np.asarray(out2), np.asarray(ref2), rtol=2e-5, atol=2e-5)

    print("KERNEL_OK")
</pallas_src>

<mosaic_0001>
module attributes {stable_mosaic.version = 11 : i64} {
  func.func @rnn_kernel(%arg0: i32, %arg1: i32, %arg2: memref<8x8x16xf32, #tpu.memory_space<vmem>>, %arg3: memref<16x128xf32, #tpu.memory_space<vmem>>, %arg4: memref<128x128xf32, #tpu.memory_space<vmem>>, %arg5: memref<1x128xf32, #tpu.memory_space<vmem>>, %arg6: memref<128x8xf32, #tpu.memory_space<vmem>>, %arg7: memref<1x8xf32, #tpu.memory_space<vmem>>, %arg8: memref<8x8xf32, #tpu.memory_space<vmem>>, %arg9: memref<8x128xf32, #tpu.memory_space<vmem>>, %arg10: memref<8x8x128xf32, #tpu.memory_space<vmem>>) attributes {dimension_semantics = [#tpu.dimension_semantics<parallel>, #tpu.dimension_semantics<arbitrary>], iteration_bounds = array<i64: 1, 1>, scalar_prefetch = 0 : i64, scratch_operands = 2 : i64, tpu.core_type = #tpu.core_type<tc>, window_params = [{transform_indices = @transform_0, window_bounds = array<i64: 8, 8, 16>}, {pipeline_mode = #tpu.pipeline_mode<synchronous>, transform_indices = @transform_1, window_bounds = array<i64: 16, 128>}, {pipeline_mode = #tpu.pipeline_mode<synchronous>, transform_indices = @transform_2, window_bounds = array<i64: 128, 128>}, {pipeline_mode = #tpu.pipeline_mode<synchronous>, transform_indices = @transform_3, window_bounds = array<i64: 1, 128>}, {pipeline_mode = #tpu.pipeline_mode<synchronous>, transform_indices = @transform_4, window_bounds = array<i64: 128, 8>}, {pipeline_mode = #tpu.pipeline_mode<synchronous>, transform_indices = @transform_5, window_bounds = array<i64: 1, 8>}, {transform_indices = @transform_6, window_bounds = array<i64: 8, 8>}]} {
    %c0_i32 = arith.constant 0 : i32
    %0 = arith.cmpi eq, %arg1, %c0_i32 : i32
    %1 = arith.extui %0 : i1 to i32
    %c0_i32_0 = arith.constant 0 : i32
    %2 = arith.cmpi ne, %1, %c0_i32_0 : i32
    scf.if %2 {
      %cst_43 = arith.constant 0.000000e+00 : f32
      %66 = vector.broadcast %cst_43 : f32 to vector<8x128xf32>
      %c0_44 = arith.constant 0 : index
      %c0_45 = arith.constant 0 : index
      %67 = vector.load %arg9[%c0_44, %c0_45] : memref<8x128xf32, #tpu.memory_space<vmem>>, vector<8x128xf32>
      tpu.vector_store %arg9[%c0_44, %c0_45], %66 {strides = array<i32>} : memref<8x128xf32, #tpu.memory_space<vmem>>, vector<8x128xf32>,
    } else {
    }
    %c0 = arith.constant 0 : index
    %c0_1 = arith.constant 0 : index
    %c0_2 = arith.constant 0 : index
    %3 = vector.load %arg2[%c0, %c0_1, %c0_2] : memref<8x8x16xf32, #tpu.memory_space<vmem>>, vector<8x8x16xf32>
    %4 = vector.shape_cast %3 : vector<8x8x16xf32> to vector<64x16xf32>
    %c0_3 = arith.constant 0 : index
    %c0_4 = arith.constant 0 : index
    %5 = vector.load %arg3[%c0_3, %c0_4] : memref<16x128xf32, #tpu.memory_space<vmem>>, vector<16x128xf32>
    %cst = arith.constant dense<0.000000e+00> : vector<64x128xf32>
    %6 = tpu.matmul %4, %5, %cst {dimension_numbers = #tpu.dot_dimension_numbers<[1], [0], [0], [1], [0, 0, 1, 1], [], []>} : vector<64x16xf32>, vector<16x128xf32>, vector<64x128xf32> -> vector<64x128xf32>
    %c0_5 = arith.constant 0 : index
    %c0_6 = arith.constant 0 : index
    %7 = vector.load %arg5[%c0_5, %c0_6] : memref<1x128xf32, #tpu.memory_space<vmem>>, vector<1x128xf32>
    %8 = vector.broadcast %7 : vector<1x128xf32> to vector<64x128xf32>
    %9 = arith.addf %6, %8 : vector<64x128xf32>
    %10 = vector.shape_cast %9 : vector<64x128xf32> to vector<8x8x128xf32>
    %c0_7 = arith.constant 0 : index
    %c0_8 = arith.constant 0 : index
    %c0_9 = arith.constant 0 : index
    %11 = vector.load %arg10[%c0_7, %c0_8, %c0_9] : memref<8x8x128xf32, #tpu.memory_space<vmem>>, vector<8x8x128xf32>
    tpu.vector_store %arg10[%c0_7, %c0_8, %c0_9], %10 {strides = array<i32>} : memref<8x8x128xf32, #tpu.memory_space<vmem>>, vector<8x8x128xf32>,
    %c0_10 = arith.constant 0 : index
    %c0_11 = arith.constant 0 : index
    %12 = vector.load %arg4[%c0_10, %c0_11] : memref<128x128xf32, #tpu.memory_space<vmem>>, vector<128x128xf32>
    %c0_12 = arith.constant 0 : index
    %c0_13 = arith.constant 0 : index
    %13 = vector.load %arg9[%c0_12, %c0_13] : memref<8x128xf32, #tpu.memory_space<vmem>>, vector<8x128xf32>
    %c0_i32_14 = arith.constant 0 : i32
    %14 = arith.index_cast %c0_i32_14 : i32 to index
    %c0_15 = arith.constant 0 : index
    %c0_16 = arith.constant 0 : index
    %15 = vector.load %arg10[%14, %c0_15, %c0_16] : memref<8x8x128xf32, #tpu.memory_space<vmem>>, vector<1x8x128xf32>
    %16 = vector.shape_cast %15 : vector<1x8x128xf32> to vector<8x128xf32>
    %cst_17 = arith.constant dense<0.000000e+00> : vector<8x128xf32>
    %17 = tpu.matmul %13, %12, %cst_17 {dimension_numbers = #tpu.dot_dimension_numbers<[1], [0], [0], [1], [0, 0, 1, 1], [], []>} : vector<8x128xf32>, vector<128x128xf32>, vector<8x128xf32> -> vector<8x128xf32>
    %18 = arith.addf %16, %17 : vector<8x128xf32>
    %19 = math.tanh %18 : vector<8x128xf32>
    %c1_i32 = arith.constant 1 : i32
    %20 = arith.index_cast %c1_i32 : i32 to index
    %c0_18 = arith.constant 0 : index
    %c0_19 = arith.constant 0 : index
    %21 = vector.load %arg10[%20, %c0_18, %c0_19] : memref<8x8x128xf32, #tpu.memory_space<vmem>>, vector<1x8x128xf32>
    %22 = vector.shape_cast %21 : vector<1x8x128xf32> to vector<8x128xf32>
    %cst_20 = arith.constant dense<0.000000e+00> : vector<8x128xf32>
    %23 = tpu.matmul %19, %12, %cst_20 {dimension_numbers = #tpu.dot_dimension_numbers<[1], [0], [0], [1], [0, 0, 1, 1], [], []>} : vector<8x128xf32>, vector<128x128xf32>, vector<8x128xf32> -> vector<8x128xf32>
    %24 = arith.addf %22, %23 : vector<8x128xf32>
    %25 = math.tanh %24 : vector<8x128xf32>
    %c2_i32 = arith.constant 2 : i32
    %26 = arith.index_cast %c2_i32 : i32 to index
    %c0_21 = arith.constant 0 : index
    %c0_22 = arith.constant 0 : index
    %27 = vector.load %arg10[%26, %c0_21, %c0_22] : memref<8x8x128xf32, #tpu.memory_space<vmem>>, vector<1x8x128xf32>
    %28 = vector.shape_cast %27 : vector<1x8x128xf32> to vector<8x128xf32>
    %cst_23 = arith.constant dense<0.000000e+00> : vector<8x128xf32>
    %29 = tpu.matmul %25, %12, %cst_23 {dimension_numbers = #tpu.dot_dimension_numbers<[1], [0], [0], [1], [0, 0, 1, 1], [], []>} : vector<8x128xf32>, vector<128x128xf32>, vector<8x128xf32> -> vector<8x128xf32>
    %30 = arith.addf %28, %29 : vector<8x128xf32>
    %31 = math.tanh %30 : vector<8x128xf32>
    %c3_i32 = arith.constant 3 : i32
    %32 = arith.index_cast %c3_i32 : i32 to index
    %c0_24 = arith.constant 0 : index
    %c0_25 = arith.constant 0 : index
    %33 = vector.load %arg10[%32, %c0_24, %c0_25] : memref<8x8x128xf32, #tpu.memory_space<vmem>>, vector<1x8x128xf32>
    %34 = vector.shape_cast %33 : vector<1x8x128xf32> to vector<8x128xf32>
    %cst_26 = arith.constant dense<0.000000e+00> : vector<8x128xf32>
    %35 = tpu.matmul %31, %12, %cst_26 {dimension_numbers = #tpu.dot_dimension_numbers<[1], [0], [0], [1], [0, 0, 1, 1], [], []>} : vector<8x128xf32>, vector<128x128xf32>, vector<8x128xf32> -> vector<8x128xf32>
    %36 = arith.addf %34, %35 : vector<8x128xf32>
    %37 = math.tanh %36 : vector<8x128xf32>
    %c4_i32 = arith.constant 4 : i32
    %38 = arith.index_cast %c4_i32 : i32 to index
    %c0_27 = arith.constant 0 : index
    %c0_28 = arith.constant 0 : index
    %39 = vector.load %arg10[%38, %c0_27, %c0_28] : memref<8x8x128xf32, #tpu.memory_space<vmem>>, vector<1x8x128xf32>
    %40 = vector.shape_cast %39 : vector<1x8x128xf32> to vector<8x128xf32>
    %cst_29 = arith.constant dense<0.000000e+00> : vector<8x128xf32>
    %41 = tpu.matmul %37, %12, %cst_29 {dimension_numbers = #tpu.dot_dimension_numbers<[1], [0], [0], [1], [0, 0, 1, 1], [], []>} : vector<8x128xf32>, vector<128x128xf32>, vector<8x128xf32> -> vector<8x128xf32>
    %42 = arith.addf %40, %41 : vector<8x128xf32>
    %43 = math.tanh %42 : vector<8x128xf32>
    %c5_i32 = arith.constant 5 : i32
    %44 = arith.index_cast %c5_i32 : i32 to index
    %c0_30 = arith.constant 0 : index
    %c0_31 = arith.constant 0 : index
    %45 = vector.load %arg10[%44, %c0_30, %c0_31] : memref<8x8x128xf32, #tpu.memory_space<vmem>>, vector<1x8x128xf32>
    %46 = vector.shape_cast %45 : vector<1x8x128xf32> to vector<8x128xf32>
    %cst_32 = arith.constant dense<0.000000e+00> : vector<8x128xf32>
    %47 = tpu.matmul %43, %12, %cst_32 {dimension_numbers = #tpu.dot_dimension_numbers<[1], [0], [0], [1], [0, 0, 1, 1], [], []>} : vector<8x128xf32>, vector<128x128xf32>, vector<8x128xf32> -> vector<8x128xf32>
    %48 = arith.addf %46, %47 : vector<8x128xf32>
    %49 = math.tanh %48 : vector<8x128xf32>
    %c6_i32 = arith.constant 6 : i32
    %50 = arith.index_cast %c6_i32 : i32 to index
    %c0_33 = arith.constant 0 : index
    %c0_34 = arith.constant 0 : index
    %51 = vector.load %arg10[%50, %c0_33, %c0_34] : memref<8x8x128xf32, #tpu.memory_space<vmem>>, vector<1x8x128xf32>
    %52 = vector.shape_cast %51 : vector<1x8x128xf32> to vector<8x128xf32>
    %cst_35 = arith.constant dense<0.000000e+00> : vector<8x128xf32>
    %53 = tpu.matmul %49, %12, %cst_35 {dimension_numbers = #tpu.dot_dimension_numbers<[1], [0], [0], [1], [0, 0, 1, 1], [], []>} : vector<8x128xf32>, vector<128x128xf32>, vector<8x128xf32> -> vector<8x128xf32>
    %54 = arith.addf %52, %53 : vector<8x128xf32>
    %55 = math.tanh %54 : vector<8x128xf32>
    %c7_i32 = arith.constant 7 : i32
    %56 = arith.index_cast %c7_i32 : i32 to index
    %c0_36 = arith.constant 0 : index
    %c0_37 = arith.constant 0 : index
    %57 = vector.load %arg10[%56, %c0_36, %c0_37] : memref<8x8x128xf32, #tpu.memory_space<vmem>>, vector<1x8x128xf32>
    %58 = vector.shape_cast %57 : vector<1x8x128xf32> to vector<8x128xf32>
    %cst_38 = arith.constant dense<0.000000e+00> : vector<8x128xf32>
    %59 = tpu.matmul %55, %12, %cst_38 {dimension_numbers = #tpu.dot_dimension_numbers<[1], [0], [0], [1], [0, 0, 1, 1], [], []>} : vector<8x128xf32>, vector<128x128xf32>, vector<8x128xf32> -> vector<8x128xf32>
    %60 = arith.addf %58, %59 : vector<8x128xf32>
    %61 = math.tanh %60 : vector<8x128xf32>
    %c8_i32 = arith.constant 8 : i32
    %c0_39 = arith.constant 0 : index
    %c0_40 = arith.constant 0 : index
    %62 = vector.load %arg9[%c0_39, %c0_40] : memref<8x128xf32, #tpu.memory_space<vmem>>, vector<8x128xf32>
    tpu.vector_store %arg9[%c0_39, %c0_40], %61 {strides = array<i32>} : memref<8x128xf32, #tpu.memory_space<vmem>>, vector<8x128xf32>,
    %c0_i32_41 = arith.constant 0 : i32
    %63 = arith.cmpi eq, %arg1, %c0_i32_41 : i32
    %64 = arith.extui %63 : i1 to i32
    %c0_i32_42 = arith.constant 0 : i32
    %65 = arith.cmpi ne, %64, %c0_i32_42 : i32
    scf.if %65 {
      %c0_43 = arith.constant 0 : index
      %c0_44 = arith.constant 0 : index
      %66 = vector.load %arg6[%c0_43, %c0_44] : memref<128x8xf32, #tpu.memory_space<vmem>>, vector<128x8xf32>
      %cst_45 = arith.constant dense<0.000000e+00> : vector<8x8xf32>
      %67 = tpu.matmul %61, %66, %cst_45 {dimension_numbers = #tpu.dot_dimension_numbers<[1], [0], [0], [1], [0, 0, 1, 1], [], []>} : vector<8x128xf32>, vector<128x8xf32>, vector<8x8xf32> -> vector<8x8xf32>
      %c0_46 = arith.constant 0 : index
      %c0_47 = arith.constant 0 : index
      %68 = vector.load %arg7[%c0_46, %c0_47] : memref<1x8xf32, #tpu.memory_space<vmem>>, vector<1x8xf32>
      %69 = vector.broadcast %68 : vector<1x8xf32> to vector<8x8xf32>
      %70 = arith.addf %67, %69 : vector<8x8xf32>
      %c0_48 = arith.constant 0 : index
      %c0_49 = arith.constant 0 : index
      %71 = vector.load %arg8[%c0_48, %c0_49] : memref<8x8xf32, #tpu.memory_space<vmem>>, vector<8x8xf32>
      tpu.vector_store %arg8[%c0_48, %c0_49], %70 {strides = array<i32>} : memref<8x8xf32, #tpu.memory_space<vmem>>, vector<8x8xf32>,
    } else {
    }
    return
  }
  func.func @transform_0(%arg0: i32, %arg1: i32) -> (i32, i32, i32) {
    %c0_i32 = arith.constant 0 : i32
    %c0_i32_0 = arith.constant 0 : i32
    return %arg1, %arg0, %c0_i32 : i32, i32, i32
  }
  func.func @transform_1(%arg0: i32, %arg1: i32) -> (i32, i32) {
    %c0_i32 = arith.constant 0 : i32
    %c0_i32_0 = arith.constant 0 : i32
    %c0_i32_1 = arith.constant 0 : i32
    return %c0_i32, %c0_i32_0 : i32, i32
  }
  func.func @transform_2(%arg0: i32, %arg1: i32) -> (i32, i32) {
    %c0_i32 = arith.constant 0 : i32
    %c0_i32_0 = arith.constant 0 : i32
    %c0_i32_1 = arith.constant 0 : i32
    return %c0_i32, %c0_i32_0 : i32, i32
  }
  func.func @transform_3(%arg0: i32, %arg1: i32) -> (i32, i32) {
    %c0_i32 = arith.constant 0 : i32
    %c0_i32_0 = arith.constant 0 : i32
    %c0_i32_1 = arith.constant 0 : i32
    return %c0_i32, %c0_i32_0 : i32, i32
  }
  func.func @transform_4(%arg0: i32, %arg1: i32) -> (i32, i32) {
    %c0_i32 = arith.constant 0 : i32
    %c0_i32_0 = arith.constant 0 : i32
    %c0_i32_1 = arith.constant 0 : i32
    return %c0_i32, %c0_i32_0 : i32, i32
  }
  func.func @transform_5(%arg0: i32, %arg1: i32) -> (i32, i32) {
    %c0_i32 = arith.constant 0 : i32
    %c0_i32_0 = arith.constant 0 : i32
    %c0_i32_1 = arith.constant 0 : i32
    return %c0_i32, %c0_i32_0 : i32, i32
  }
  func.func @transform_6(%arg0: i32, %arg1: i32) -> (i32, i32) {
    %c0_i32 = arith.constant 0 : i32
    %c0_i32_0 = arith.constant 0 : i32
    return %arg0, %c0_i32 : i32, i32
  }
}

</mosaic_0001>

<llo_original>
// kernel: tpu_custom_call.1
$region0: #{tpu_custom_call.1}
  #allocation0 [shape = 'u32[]', space=smem, size = 0x4, offset = 0x4, fixed_abs, tag = 'smem constant byte address 0x4 - core index']
  #allocation1 [shape = 'u32[72,128]{1,0:T(1,128)}', space=vmem, size = 0x9000, scoped, tag = 'internal scratch']
  #allocation2 [shape = 'f32[8,128]{1,0:T(8,128)}', space=vmem, size = 0x1000, scoped, tag = 'scratch operand']
  #allocation3 [shape = 'f32[8,8,128]{2,1,0:T(8,128)}', space=vmem, size = 0x8000, scoped, tag = 'scratch operand']
  %s0 = inlined_call_operand.hbm [shape: f32[8,8,16], index: 0, kind: input, shape index: {}]
  %s1 = inlined_call_operand.hbm [shape: f32[16,128], index: 1, kind: input, shape index: {}]
  %s2 = inlined_call_operand.vmem [shape: f32[128,128], index: 2, kind: input, shape index: {}]
  %s3 = inlined_call_operand.vmem [shape: f32[1,128], index: 3, kind: input, shape index: {}]
  %s4 = inlined_call_operand.vmem [shape: f32[128,8], index: 4, kind: input, shape index: {}]
  %s5 = inlined_call_operand.vmem [shape: f32[1,8], index: 5, kind: input, shape index: {}]
  %s6 = inlined_call_operand.hbm [shape: f32[8,8], index: 6, kind: output, shape index: {}]
  %s7 = sld [smem:[#allocation0]]
  $region50: #{tpu_custom_call.1} parent=0
    _
  %s9 = ssub.s32 1, %s7
  %s10 = scalar_select 0, %s9, %s7
  $region1: #{tpu_custom_call.1} parent=0
    #allocation4 [shape = 'u8[32768]{0}', space=vmem, size = 0x8000, scoped, tag = 'input window, operand 0, single buffered']
    #allocation5 [shape = 's32[1]{0}', space=sflag, size = 0x4, scoped, tag = 'scoped memory for tpu_custom_call.1']
    #allocation6 [shape = 's32[1]{0}', space=sflag, size = 0x4, scoped, tag = 'scoped memory for tpu_custom_call.1']
    #allocation7 [shape = 'u8[8192]{0}', space=vmem, size = 0x2000, scoped, tag = 'input window, operand 1, single buffered']
    #allocation8 [shape = 's32[1]{0}', space=sflag, size = 0x4, scoped, tag = 'scoped memory for tpu_custom_call.1']
    #allocation9 [shape = 'u8[4096]{0}', space=vmem, size = 0x1000, scoped, tag = 'output window, operand 0, single buffered']
    %11 = vsyncpa [#allocation5], 0
    %12 = vsyncpa [#allocation8], 0
    %13 = vsyncpa [#allocation6], 0
    // Predicated region
    $region2: #{tpu_custom_call.1} parent=1 // pred_check
      _
    $region3: #{tpu_custom_call.1} parent=1 // pred_check_branch
      %15 = sbr.rel (0) target = $region5
    $region4: #{tpu_custom_call.1} parent=1 // pred_region
      %17 = vsyncadd [#allocation5], 0
      %s18 = sshll.u32 %s0, 4
      %s19 = int_to_ptr.hbm [resolvable:$true] %s18
      %s20 = sshll.u32 [#allocation4], 4
      %s21 = int_to_ptr.vmem [resolvable:$true] %s20
      %26 = dma.hbm_to_vmem [thread:$0]  %s19, 1024, %s21, [#allocation5], 128, 128, 8
    $region5: #{tpu_custom_call.1} parent=1 // pred_fallthru
      _
    // Predicated region
    $region6: #{tpu_custom_call.1} parent=1 // pred_check
      _
    $region7: #{tpu_custom_call.1} parent=1 // pred_check_branch
      %28 = sbr.rel (0) target = $region9
    $region8: #{tpu_custom_call.1} parent=1 // pred_region
      %30 = vsyncadd [#allocation8], 0
      %s31 = sshll.u32 %s1, 4
      %s32 = int_to_ptr.hbm [resolvable:$true] %s31
      %s33 = sshll.u32 [#allocation7], 4
      %s34 = int_to_ptr.vmem [resolvable:$true] %s33
      %39 = dma.hbm_to_vmem [thread:$0]  %s32, 256, %s34, [#allocation8], 128, 128, 8
    $region9: #{tpu_custom_call.1} parent=1 // pred_fallthru
      _
    // Predicated region
    $region10: #{tpu_custom_call.1} parent=1 // pred_check
      _
    $region11: #{tpu_custom_call.1} parent=1 // pred_check_branch
      %41 = sbr.rel (0) target = $region13
    $region12: #{tpu_custom_call.1} parent=1 // pred_region
      _
    $region13: #{tpu_custom_call.1} parent=1 // pred_fallthru
      _
    // Predicated region
    $region14: #{tpu_custom_call.1} parent=1 // pred_check
      _
    $region15: #{tpu_custom_call.1} parent=1 // pred_check_branch
      %43 = sbr.rel (0) target = $region17
    $region16: #{tpu_custom_call.1} parent=1 // pred_region
      _
    $region17: #{tpu_custom_call.1} parent=1 // pred_fallthru
      _
    // Predicated region
    $region18: #{tpu_custom_call.1} parent=1 // pred_check
      _
    $region19: #{tpu_custom_call.1} parent=1 // pred_check_branch
      %45 = sbr.rel (0) target = $region21
    $region20: #{tpu_custom_call.1} parent=1 // pred_region
      _
    $region21: #{tpu_custom_call.1} parent=1 // pred_fallthru
      _
    // Predicated region
    $region22: #{tpu_custom_call.1} parent=1 // pred_check
      _
    $region23: #{tpu_custom_call.1} parent=1 // pred_check_branch
      %47 = sbr.rel (0) target = $region25
    $region24: #{tpu_custom_call.1} parent=1 // pred_region
      _
    $region25: #{tpu_custom_call.1} parent=1 // pred_fallthru
      _
    // Predicated region
    $region26: #{tpu_custom_call.1} parent=1 // pred_check
      _
    $region27: #{tpu_custom_call.1} parent=1 // pred_check_branch
      %49 = sbr.rel (0) target = $region29
    $region28: #{tpu_custom_call.1} parent=1 // pred_region
      %51 = dma.done [#allocation5], 1024
    $region29: #{tpu_custom_call.1} parent=1 // pred_fallthru
      _
    // Predicated region
    $region30: #{tpu_custom_call.1} parent=1 // pred_check
      _
    $region31: #{tpu_custom_call.1} parent=1 // pred_check_branch
      %53 = sbr.rel (0) target = $region33
    $region32: #{tpu_custom_call.1} parent=1 // pred_region
      %55 = dma.done [#allocation8], 256
    $region33: #{tpu_custom_call.1} parent=1 // pred_fallthru
      _
    %p56 = scmp.eq.s32.totalorder 0, 0
    // Predicated region
    $region34: #{tpu_custom_call.1} parent=1 // pred_check
      %p57 = pneg %p56
    $region35: #{tpu_custom_call.1} parent=1 // pred_check_branch
      %59 = sbr.rel (%p57) target = $region37
    $region36: #{tpu_custom_call.1} parent=1 // pred_region
      %60 = vst [vmem:[#allocation2] sm:$0xff] 0.0
    $region37: #{tpu_custom_call.1} parent=1 // pred_fallthru
      _
    %v61 = vld [vmem:[#allocation4] sm:$0xff]
    %v62 = vld [vmem:[#allocation4 + $0x8] sm:$0xff]
    %v63 = vld [vmem:[#allocation4 + $0x10] sm:$0xff]
    %v64 = vld [vmem:[#allocation4 + $0x18] sm:$0xff]
    %v65 = vld [vmem:[#allocation4 + $0x20] sm:$0xff]
    %v66 = vld [vmem:[#allocation4 + $0x28] sm:$0xff]
    %v67 = vld [vmem:[#allocation4 + $0x30] sm:$0xff]
    %v68 = vld [vmem:[#allocation4 + $0x38] sm:$0xff]
    %v69 = vld [vmem:[#allocation7] sm:$0xff]
    %v70 = vld [vmem:[#allocation7 + $0x8] sm:$0xff]
    %v71 = vld [vmem:[%s3] sm:$0x1]
    %v73 = vperm.slane %v71, 0
    %vm75 = vcmask 130048
    %v77 = vsel %vm75, %v61, 0
    %v80 = vsel %vm75, %v62, 0
    %v83 = vsel %vm75, %v63, 0
    %v86 = vsel %vm75, %v64, 0
    %v89 = vsel %vm75, %v65, 0
    %v92 = vsel %vm75, %v66, 0
    %v95 = vsel %vm75, %v67, 0
    %v98 = vsel %vm75, %v68, 0
    %100 = vmatpush.msra.mxu0 0.0
    %101 = vmatpush.msra.mxu0 0.0
    %102 = vmatpush.msra.mxu0 0.0
    %103 = vmatpush.msra.mxu0 0.0
    %104 = vmatpush.msra.mxu0 0.0
    %105 = vmatpush.msra.mxu0 0.0
    %106 = vmatpush.msra.mxu0 0.0
    %107 = vmatpush.msra.mxu0 0.0
    %108 = vmatpush.msra.mxu0 0.0
    %109 = vmatpush.msra.mxu0 0.0
    %110 = vmatpush.msra.mxu0 0.0
    %111 = vmatpush.msra.mxu0 0.0
    %112 = vmatpush.msra.mxu0 0.0
    %113 = vmatpush.msra.mxu0 0.0
    %114 = vmatpush.msra.mxu0 %v70
    %115 = vmatpush.msra.mxu0 %v69
    %116 = vmatmul.f32.gmra.mxu0 %v77
    %v117 = vpop.f32.mrf.mxu0
    %v118 = vadd.f32 %v73, %v117
    %119 = vmatmul.f32.gmra.mxu0 %v80
    %v120 = vpop.f32.mrf.mxu0
    %v121 = vadd.f32 %v73, %v120
    %122 = vmatmul.f32.gmra.mxu0 %v83
    %v123 = vpop.f32.mrf.mxu0
    %v124 = vadd.f32 %v73, %v123
    %125 = vmatmul.f32.gmra.mxu0 %v86
    %v126 = vpop.f32.mrf.mxu0
    %v127 = vadd.f32 %v73, %v126
    %128 = vmatmul.f32.gmra.mxu0 %v89
    %v129 = vpop.f32.mrf.mxu0
    %v130 = vadd.f32 %v73, %v129
    %131 = vmatmul.f32.gmra.mxu0 %v92
    %v132 = vpop.f32.mrf.mxu0
    %v133 = vadd.f32 %v73, %v132
    %134 = vmatmul.f32.gmra.mxu0 %v95
    %v135 = vpop.f32.mrf.mxu0
    %v136 = vadd.f32 %v73, %v135
    %137 = vmatmul.f32.gmra.mxu0 %v98
    %v138 = vpop.f32.mrf.mxu0
    %v139 = vadd.f32 %v73, %v138
    %140 = vdwg.mxu0
    %141 = vst [vmem:[#allocation3] sm:$0xff] %v118
    %142 = vst [vmem:[#allocation3 + $0x8] sm:$0xff] %v121
    %143 = vst [vmem:[#allocation3 + $0x10] sm:$0xff] %v124
    %144 = vst [vmem:[#allocation3 + $0x18] sm:$0xff] %v127
    %145 = vst [vmem:[#allocation3 + $0x20] sm:$0xff] %v130
    %146 = vst [vmem:[#allocation3 + $0x28] sm:$0xff] %v133
    %147 = vst [vmem:[#allocation3 + $0x30] sm:$0xff] %v136
    %148 = vst [vmem:[#allocation3 + $0x38] sm:$0xff] %v139
    %v149 = vld [vmem:[%s2] sm:$0xff]
    %v150 = vld [vmem:[%s2 + $0x8] sm:$0xff]
    %v151 = vld [vmem:[%s2 + $0x10] sm:$0xff]
    %v152 = vld [vmem:[%s2 + $0x18] sm:$0xff]
    %v153 = vld [vmem:[%s2 + $0x20] sm:$0xff]
    %v154 = vld [vmem:[%s2 + $0x28] sm:$0xff]
    %v155 = vld [vmem:[%s2 + $0x30] sm:$0xff]
    %v156 = vld [vmem:[%s2 + $0x38] sm:$0xff]
    %v157 = vld [vmem:[%s2 + $0x40] sm:$0xff]
    %v158 = vld [vmem:[%s2 + $0x48] sm:$0xff]
    %v159 = vld [vmem:[%s2 + $0x50] sm:$0xff]
    %v160 = vld [vmem:[%s2 + $0x58] sm:$0xff]
    %v161 = vld [vmem:[%s2 + $0x60] sm:$0xff]
    %v162 = vld [vmem:[%s2 + $0x68] sm:$0xff]
    %v163 = vld [vmem:[%s2 + $0x70] sm:$0xff]
    %v164 = vld [vmem:[%s2 + $0x78] sm:$0xff]
    %v165 = vld [vmem:[#allocation2] sm:$0xff]
    %v166 = vld [vmem:[#allocation3] sm:$0xff]
    %167 = vmatpush.msra.mxu0 %v164
    %168 = vmatpush.msra.mxu0 %v163
    %169 = vmatpush.msra.mxu0 %v162
    %170 = vmatpush.msra.mxu0 %v161
    %171 = vmatpush.msra.mxu0 %v160
    %172 = vmatpush.msra.mxu0 %v159
    %173 = vmatpush.msra.mxu0 %v158
    %174 = vmatpush.msra.mxu0 %v157
    %175 = vmatpush.msra.mxu0 %v156
    %176 = vmatpush.msra.mxu0 %v155
    %177 = vmatpush.msra.mxu0 %v154
    %178 = vmatpush.msra.mxu0 %v153
    %179 = vmatpush.msra.mxu0 %v152
    %180 = vmatpush.msra.mxu0 %v151
    %181 = vmatpush.msra.mxu0 %v150
    %182 = vmatpush.msra.mxu0 %v149
    %183 = vmatmul.f32.gmra.mxu0 %v165
    %v184 = vpop.f32.mrf.mxu0
    %v185 = vadd.f32 0.0, %v184
    %186 = vdwg.mxu0
    %v187 = vadd.f32 %v166, %v185
    %v188 = vtanh.pop %v187
    %s189 = scalar_lea.vmem [#allocation3], 8
    %v190 = vld [vmem:[%s189] sm:$0xff]
    %191 = vmatpush.msra.mxu0 %v164
    %192 = vmatpush.msra.mxu0 %v163
    %193 = vmatpush.msra.mxu0 %v162
    %194 = vmatpush.msra.mxu0 %v161
    %195 = vmatpush.msra.mxu0 %v160
    %196 = vmatpush.msra.mxu0 %v159
    %197 = vmatpush.msra.mxu0 %v158
    %198 = vmatpush.msra.mxu0 %v157
    %199 = vmatpush.msra.mxu0 %v156
    %200 = vmatpush.msra.mxu0 %v155
    %201 = vmatpush.msra.mxu0 %v154
    %202 = vmatpush.msra.mxu0 %v153
    %203 = vmatpush.msra.mxu0 %v152
    %204 = vmatpush.msra.mxu0 %v151
    %205 = vmatpush.msra.mxu0 %v150
    %206 = vmatpush.msra.mxu0 %v149
    %207 = vmatmul.f32.gmra.mxu0 %v188
    %v208 = vpop.f32.mrf.mxu0
    %v209 = vadd.f32 0.0, %v208
    %210 = vdwg.mxu0
    %v211 = vadd.f32 %v190, %v209
    %v212 = vtanh.pop %v211
    %s213 = scalar_lea.vmem [#allocation3], 16
    %v214 = vld [vmem:[%s213] sm:$0xff]
    %215 = vmatpush.msra.mxu0 %v164
    %216 = vmatpush.msra.mxu0 %v163
    %217 = vmatpush.msra.mxu0 %v162
    %218 = vmatpush.msra.mxu0 %v161
    %219 = vmatpush.msra.mxu0 %v160
    %220 = vmatpush.msra.mxu0 %v159
    %221 = vmatpush.msra.mxu0 %v158
    %222 = vmatpush.msra.mxu0 %v157
    %223 = vmatpush.msra.mxu0 %v156
    %224 = vmatpush.msra.mxu0 %v155
    %225 = vmatpush.msra.mxu0 %v154
    %226 = vmatpush.msra.mxu0 %v153
    %227 = vmatpush.msra.mxu0 %v152
    %228 = vmatpush.msra.mxu0 %v151
    %229 = vmatpush.msra.mxu0 %v150
    %230 = vmatpush.msra.mxu0 %v149
    %231 = vmatmul.f32.gmra.mxu0 %v212
    %v232 = vpop.f32.mrf.mxu0
    %v233 = vadd.f32 0.0, %v232
    %234 = vdwg.mxu0
    %v235 = vadd.f32 %v214, %v233
    %v236 = vtanh.pop %v235
    %s237 = scalar_lea.vmem [#allocation3], 24
    %v238 = vld [vmem:[%s237] sm:$0xff]
    %239 = vmatpush.msra.mxu0 %v164
    %240 = vmatpush.msra.mxu0 %v163
    %241 = vmatpush.msra.mxu0 %v162
    %242 = vmatpush.msra.mxu0 %v161
    %243 = vmatpush.msra.mxu0 %v160
    %244 = vmatpush.msra.mxu0 %v159
    %245 = vmatpush.msra.mxu0 %v158
    %246 = vmatpush.msra.mxu0 %v157
    %247 = vmatpush.msra.mxu0 %v156
    %248 = vmatpush.msra.mxu0 %v155
    %249 = vmatpush.msra.mxu0 %v154
    %250 = vmatpush.msra.mxu0 %v153
    %251 = vmatpush.msra.mxu0 %v152
    %252 = vmatpush.msra.mxu0 %v151
    %253 = vmatpush.msra.mxu0 %v150
    %254 = vmatpush.msra.mxu0 %v149
    %255 = vmatmul.f32.gmra.mxu0 %v236
    %v256 = vpop.f32.mrf.mxu0
    %v257 = vadd.f32 0.0, %v256
    %258 = vdwg.mxu0
    %v259 = vadd.f32 %v238, %v257
    %v260 = vtanh.pop %v259
    %s261 = scalar_lea.vmem [#allocation3], 32
    %v262 = vld [vmem:[%s261] sm:$0xff]
    %263 = vmatpush.msra.mxu0 %v164
    %264 = vmatpush.msra.mxu0 %v163
    %265 = vmatpush.msra.mxu0 %v162
    %266 = vmatpush.msra.mxu0 %v161
    %267 = vmatpush.msra.mxu0 %v160
    %268 = vmatpush.msra.mxu0 %v159
    %269 = vmatpush.msra.mxu0 %v158
    %270 = vmatpush.msra.mxu0 %v157
    %271 = vmatpush.msra.mxu0 %v156
    %272 = vmatpush.msra.mxu0 %v155
    %273 = vmatpush.msra.mxu0 %v154
    %274 = vmatpush.msra.mxu0 %v153
    %275 = vmatpush.msra.mxu0 %v152
    %276 = vmatpush.msra.mxu0 %v151
    %277 = vmatpush.msra.mxu0 %v150
    %278 = vmatpush.msra.mxu0 %v149
    %279 = vmatmul.f32.gmra.mxu0 %v260
    %v280 = vpop.f32.mrf.mxu0
    %v281 = vadd.f32 0.0, %v280
    %282 = vdwg.mxu0
    %v283 = vadd.f32 %v262, %v281
    %v284 = vtanh.pop %v283
    %s285 = scalar_lea.vmem [#allocation3], 40
    %v286 = vld [vmem:[%s285] sm:$0xff]
    %287 = vmatpush.msra.mxu0 %v164
    %288 = vmatpush.msra.mxu0 %v163
    %289 = vmatpush.msra.mxu0 %v162
    %290 = vmatpush.msra.mxu0 %v161
    %291 = vmatpush.msra.mxu0 %v160
    %292 = vmatpush.msra.mxu0 %v159
    %293 = vmatpush.msra.mxu0 %v158
    %294 = vmatpush.msra.mxu0 %v157
    %295 = vmatpush.msra.mxu0 %v156
    %296 = vmatpush.msra.mxu0 %v155
    %297 = vmatpush.msra.mxu0 %v154
    %298 = vmatpush.msra.mxu0 %v153
    %299 = vmatpush.msra.mxu0 %v152
    %300 = vmatpush.msra.mxu0 %v151
    %301 = vmatpush.msra.mxu0 %v150
    %302 = vmatpush.msra.mxu0 %v149
    %303 = vmatmul.f32.gmra.mxu0 %v284
    %v304 = vpop.f32.mrf.mxu0
    %v305 = vadd.f32 0.0, %v304
    %306 = vdwg.mxu0
    %v307 = vadd.f32 %v286, %v305
    %v308 = vtanh.pop %v307
    %s309 = scalar_lea.vmem [#allocation3], 48
    %v310 = vld [vmem:[%s309] sm:$0xff]
    %311 = vmatpush.msra.mxu0 %v164
    %312 = vmatpush.msra.mxu0 %v163
    %313 = vmatpush.msra.mxu0 %v162
    %314 = vmatpush.msra.mxu0 %v161
    %315 = vmatpush.msra.mxu0 %v160
    %316 = vmatpush.msra.mxu0 %v159
    %317 = vmatpush.msra.mxu0 %v158
    %318 = vmatpush.msra.mxu0 %v157
    %319 = vmatpush.msra.mxu0 %v156
    %320 = vmatpush.msra.mxu0 %v155
    %321 = vmatpush.msra.mxu0 %v154
    %322 = vmatpush.msra.mxu0 %v153
    %323 = vmatpush.msra.mxu0 %v152
    %324 = vmatpush.msra.mxu0 %v151
    %325 = vmatpush.msra.mxu0 %v150
    %326 = vmatpush.msra.mxu0 %v149
    %327 = vmatmul.f32.gmra.mxu0 %v308
    %v328 = vpop.f32.mrf.mxu0
    %v329 = vadd.f32 0.0, %v328
    %330 = vdwg.mxu0
    %v331 = vadd.f32 %v310, %v329
    %v332 = vtanh.pop %v331
    %s333 = scalar_lea.vmem [#allocation3], 56
    %v334 = vld [vmem:[%s333] sm:$0xff]
    %335 = vmatpush.msra.mxu0 %v164
    %336 = vmatpush.msra.mxu0 %v163
    %337 = vmatpush.msra.mxu0 %v162
    %338 = vmatpush.msra.mxu0 %v161
    %339 = vmatpush.msra.mxu0 %v160
    %340 = vmatpush.msra.mxu0 %v159
    %341 = vmatpush.msra.mxu0 %v158
    %342 = vmatpush.msra.mxu0 %v157
    %343 = vmatpush.msra.mxu0 %v156
    %344 = vmatpush.msra.mxu0 %v155
    %345 = vmatpush.msra.mxu0 %v154
    %346 = vmatpush.msra.mxu0 %v153
    %347 = vmatpush.msra.mxu0 %v152
    %348 = vmatpush.msra.mxu0 %v151
    %349 = vmatpush.msra.mxu0 %v150
    %350 = vmatpush.msra.mxu0 %v149
    %351 = vmatmul.f32.gmra.mxu0 %v332
    %v352 = vpop.f32.mrf.mxu0
    %v353 = vadd.f32 0.0, %v352
    %354 = vdwg.mxu0
    %v355 = vadd.f32 %v334, %v353
    %v356 = vtanh.pop %v355
    %357 = vst [vmem:[#allocation2] sm:$0xff] %v356
    // Predicated region
    $region38: #{tpu_custom_call.1} parent=1 // pred_check
      %p358 = pneg %p56
    $region39: #{tpu_custom_call.1} parent=1 // pred_check_branch
      %360 = sbr.rel (%p358) target = $region41
    $region40: #{tpu_custom_call.1} parent=1 // pred_region
      %v361 = vld [vmem:[%s4] sm:$0xff]
      %v362 = vld [vmem:[%s4 + $0x8] sm:$0xff]
      %v363 = vld [vmem:[%s4 + $0x10] sm:$0xff]
      %v364 = vld [vmem:[%s4 + $0x18] sm:$0xff]
      %v365 = vld [vmem:[%s4 + $0x20] sm:$0xff]
      %v366 = vld [vmem:[%s4 + $0x28] sm:$0xff]
      %v367 = vld [vmem:[%s4 + $0x30] sm:$0xff]
      %v368 = vld [vmem:[%s4 + $0x38] sm:$0xff]
      %v369 = vld [vmem:[%s4 + $0x40] sm:$0xff]
      %v370 = vld [vmem:[%s4 + $0x48] sm:$0xff]
      %v371 = vld [vmem:[%s4 + $0x50] sm:$0xff]
      %v372 = vld [vmem:[%s4 + $0x58] sm:$0xff]
      %v373 = vld [vmem:[%s4 + $0x60] sm:$0xff]
      %v374 = vld [vmem:[%s4 + $0x68] sm:$0xff]
      %v375 = vld [vmem:[%s4 + $0x70] sm:$0xff]
      %v376 = vld [vmem:[%s4 + $0x78] sm:$0xff]
      %v377 = vld [vmem:[%s5] sm:$0x1]
      %v379 = vperm.slane %v377, 0
      %381 = vmatpush.msra.mxu0 %v376
      %382 = vmatpush.msra.mxu0 %v375
      %383 = vmatpush.msra.mxu0 %v374
      %384 = vmatpush.msra.mxu0 %v373
      %385 = vmatpush.msra.mxu0 %v372
      %386 = vmatpush.msra.mxu0 %v371
      %387 = vmatpush.msra.mxu0 %v370
      %388 = vmatpush.msra.mxu0 %v369
      %389 = vmatpush.msra.mxu0 %v368
      %390 = vmatpush.msra.mxu0 %v367
      %391 = vmatpush.msra.mxu0 %v366
      %392 = vmatpush.msra.mxu0 %v365
      %393 = vmatpush.msra.mxu0 %v364
      %394 = vmatpush.msra.mxu0 %v363
      %395 = vmatpush.msra.mxu0 %v362
      %396 = vmatpush.msra.mxu0 %v361
      %397 = vmatmul.f32.gmra.mxu0 %v356
      %v398 = vpop.f32.mrf.mxu0
      %v399 = vadd.f32 %v379, %v398
      %400 = vdwg.mxu0
      %vm401 = vcmask 64512
      %402 = vst.msk [vmem:[#allocation9] sm:$0xff] %vm401, %v399
    $region41: #{tpu_custom_call.1} parent=1 // pred_fallthru
      _
    // Predicated region
    $region42: #{tpu_custom_call.1} parent=1 // pred_check
      _
    $region43: #{tpu_custom_call.1} parent=1 // pred_check_branch
      %404 = sbr.rel (0) target = $region45
    $region44: #{tpu_custom_call.1} parent=1 // pred_region
      %406 = vsyncadd [#allocation6], 0
      %s408 = sshll.u32 [#allocation9], 4
      %s409 = int_to_ptr.vmem [resolvable:$true] %s408
      %s410 = sshll.u32 %s6, 4
      %s411 = int_to_ptr.hbm [resolvable:$true] %s410
      %413 = dma.vmem_to_hbm [thread:$0]  %s409, 128, %s411, [#allocation6]
    $region45: #{tpu_custom_call.1} parent=1 // pred_fallthru
      _
    // Predicated region
    $region46: #{tpu_custom_call.1} parent=1 // pred_check
      _
    $region47: #{tpu_custom_call.1} parent=1 // pred_check_branch
      %415 = sbr.rel (0) target = $region49
    $region48: #{tpu_custom_call.1} parent=1 // pred_region
      %417 = dma.done [#allocation6], 128
    $region49: #{tpu_custom_call.1} parent=1 // pred_fallthru
      _
    %418 = vsyncpa [#allocation5], 1
    %419 = vsyncpa [#allocation8], 1
    %420 = vsyncpa [#allocation6], 1

</llo_original>
